<compile_context>
chip_gen: v5e
topology: v5e:2x2
jax: 0.10.0
libtpu: 0.0.40
codegen_flags: <defaults>
</compile_context>

<pallas_src>
import jax
import jax.numpy as jnp
from jax.experimental import pallas as pl
from jax.experimental.pallas import tpu as pltpu

CHANNELS = 8             # self.channels
LATENT = 16              # latent dim fed to the expander
BAND_SIZES = (64, 128)   # feature.band_sizes (multiples of 32)
LEAKY_SLOPE = 0.2
N_FRAMES = 32            # the fixed "32" in the forward's reshape

# ---- static lane layout (per-band regions of the fused hidden / output) ----
H_WIDTHS = tuple(band * CHANNELS for band in BAND_SIZES)                  # (512, 1024)
H_OFFSETS = tuple(int(sum(H_WIDTHS[:i])) for i in range(len(BAND_SIZES)))  # (0, 512)
H_LANES = int(sum(H_WIDTHS))                                              # 1536
OUT_PADDED = tuple((-(-band // 128)) * 128 for band in BAND_SIZES)        # (128, 128)
OUT_OFFSETS = tuple(int(sum(OUT_PADDED[:i])) for i in range(len(BAND_SIZES)))  # (0, 128)
OUT_LANES = int(sum(OUT_PADDED))                                          # 256


# ----------------------------- Pallas kernel -------------------------------

def _decoder_kernel(x_ref, wup_ref, bup_ref, wot_ref, bo_ref, o_ref):
    """One batch tile, every band.

    x_ref  : (TB, LATENT)      f32   per-step block
    wup_ref: (LATENT, H_LANES) bf16  fused expander+upsample weights (resident)
    bup_ref: (1, H_LANES)      f32   fused bias (resident)
    wot_ref: (1, H_LANES)      f32   Conv1d(C,1,1) weights tiled channel-major
    bo_ref : (1, OUT_LANES)    f32   Conv1d(C,1,1) biases broadcast per band
    o_ref  : (TB, OUT_LANES)   f32   lane-dense packed output
    """
    x = x_ref[...].astype(jnp.bfloat16)
    # Single fused MXU pass for all bands (bf16 in, f32 accumulate).
    h = jnp.dot(x, wup_ref[...], preferred_element_type=jnp.float32)
    h = h + bup_ref[...]
    h = jnp.where(h > 0.0, h, LEAKY_SLOPE * h)      # LeakyReLU(0.2), f32
    h = h * wot_ref[...]                            # fold Conv1d(C,1,1) weights (VPU)

    # Per band: sum the C channel-major lane slices -> (TB, band).
    pieces = []
    for band, h_off, pad_w in zip(BAND_SIZES, H_OFFSETS, OUT_PADDED):
        acc = h[:, h_off:h_off + band]
        for c in range(1, CHANNELS):                # unrolled at trace time
            s = h_off + c * band
            acc = acc + h[:, s:s + band]
        pieces.append(acc)
        if pad_w > band:                            # pad to a 128-lane boundary
            pieces.append(jnp.zeros((acc.shape[0], pad_w - band), jnp.float32))
    # One unmasked, lane-dense store of all bands.
    o_ref[...] = jnp.concatenate(pieces, axis=-1) + bo_ref[...]


# ------------------------------ JAX wrapper --------------------------------

def decoder_shell_forward(x, fused, *, tile_b=8):
    """x: (B, LATENT, 1) NCW.  Returns {band_size: (B, 1, band_size)}."""
    B = x.shape[0]
    x2d = x.reshape(B, LATENT).astype(jnp.float32)
    n_tiles = -(-B // tile_b)
    b_pad = n_tiles * tile_b
    if b_pad != B:
        x2d = jnp.pad(x2d, ((0, b_pad - B), (0, 0)))

    out = pl.pallas_call(
        _decoder_kernel,
        out_shape=jax.ShapeDtypeStruct((b_pad, OUT_LANES), jnp.float32),
        grid=(n_tiles,),
        in_specs=[
            pl.BlockSpec((tile_b, LATENT), lambda i: (i, 0)),     # x: per-step block
            pl.BlockSpec((LATENT, H_LANES), lambda i: (0, 0)),    # weights: resident
            pl.BlockSpec((1, H_LANES), lambda i: (0, 0)),
            pl.BlockSpec((1, H_LANES), lambda i: (0, 0)),
            pl.BlockSpec((1, OUT_LANES), lambda i: (0, 0)),
        ],
        out_specs=pl.BlockSpec((tile_b, OUT_LANES), lambda i: (i, 0)),
        compiler_params=pltpu.CompilerParams(
            dimension_semantics=("parallel",)),                   # v7x dual-TC sharding
    )(x2d, fused["wup"], fused["bup"], fused["wot"], fused["bo_row"])

    out = out[:B]
    return {band: out[:, off:off + band][:, None, :]
            for band, off in zip(BAND_SIZES, OUT_OFFSETS)}


# --------------------------- parameter creation ----------------------------

def init_raw_params(key):
    """Raw parameters mirroring the PyTorch module (channels-last matrices)."""
    def uni(k, shape, scale=0.1):
        return jax.random.uniform(k, shape, jnp.float32, -scale, scale)

    keys = jax.random.split(key, 2 + 4 * len(BAND_SIZES))
    raw = {
        "expander": (
            uni(keys[0], (LATENT, N_FRAMES * CHANNELS)),   # ConvT(latent, C, 32)
            uni(keys[1], (1, N_FRAMES * CHANNELS)),
        ),
        "bands": {},
    }
    for i, band in enumerate(BAND_SIZES):
        f = band // N_FRAMES
        k0, k1, k2, k3 = keys[2 + 4 * i: 6 + 4 * i]
        raw["bands"][band] = (
            uni(k0, (CHANNELS, f * CHANNELS)),  # ConvTranspose1d(C, C, f, stride=f)
            uni(k1, (1, f * CHANNELS)),
            uni(k2, (CHANNELS,)),               # Conv1d(C, 1, 1) weight
            uni(k3, (1, 1)),                    # Conv1d(C, 1, 1) bias (scalar)
        )
    return raw


def fold_params(raw):
    """Host-side (one-time) folding into lane-dense, channel-major matrices."""
    w_exp, b_exp = raw["expander"]
    eye32 = jnp.eye(N_FRAMES, dtype=jnp.float32)
    wup_cols, bup_cols, wot_cols = [], [], []
    bo_row = jnp.zeros((1, OUT_LANES), jnp.float32)
    for band, o_off in zip(BAND_SIZES, OUT_OFFSETS):
        wu, bu, wo, bo = raw["bands"][band]
        # Fold expander @ per-band upsample.  Column index = m*C + c where
        # m = output position in [0, band) and c = channel.
        wu_big = jnp.kron(eye32, wu)                         # (32*C, band*C)
        wup_b = w_exp @ wu_big                               # (LATENT, band*C)
        bup_b = b_exp @ wu_big + jnp.tile(bu, (1, N_FRAMES)) # (1, band*C)
        # Reorder columns channel-major: new col c*band + m  <-  old col m*C + c.
        perm = (jnp.arange(band)[None, :] * CHANNELS
                + jnp.arange(CHANNELS)[:, None]).reshape(-1)
        wup_cols.append(wup_b[:, perm])
        bup_cols.append(bup_b[:, perm])
        # Conv1d(C,1,1) weights tiled to the same channel-major layout.
        wot_cols.append(jnp.repeat(wo, band)[None, :])       # (1, band*C)
        bo_row = bo_row.at[0, o_off:o_off + band].set(bo[0, 0])
    return {
        "wup": jnp.concatenate(wup_cols, axis=1).astype(jnp.bfloat16),  # bf16 MXU weights
        "bup": jnp.concatenate(bup_cols, axis=1),                        # f32
        "wot": jnp.concatenate(wot_cols, axis=1),                        # f32
        "bo_row": bo_row,                                                # f32
    }


# ------------------------------- reference ---------------------------------

def reference_forward(x, raw):
    """Pure-jnp reference of the ORIGINAL (un-folded) forward, in f32."""
    B = x.shape[0]
    x2d = x.reshape(B, LATENT).astype(jnp.float32)
    w_exp, b_exp = raw["expander"]
    e = x2d @ w_exp + b_exp                                # (B, 32*C)
    e2d = e.reshape(B * N_FRAMES, CHANNELS)
    outs = {}
    for band, (wu, bu, wo, bo) in raw["bands"].items():
        f = band // N_FRAMES
        h = e2d @ wu + bu                                  # (B*32, f*C)
        h = jnp.where(h > 0, h, LEAKY_SLOPE * h)
        o = (h.reshape(B * N_FRAMES, f, CHANNELS) * wo[None, None, :]).sum(-1)
        o = o + bo[0, 0]                                   # (B*32, f)
        outs[band] = o.reshape(B, band)[:, None, :]
    return outs


# ---------------------------------- main -----------------------------------

if __name__ == "__main__":
    key = jax.random.PRNGKey(0)
    pkey, xkey = jax.random.split(key)
    raw_params = init_raw_params(pkey)
    fused_params = fold_params(raw_params)

    B = 16  # two batch tiles of 8 -> exercises the grid / resident weights
    x = jax.random.normal(xkey, (B, LATENT, 1), jnp.float32)  # NCW input

    out = decoder_shell_forward(x, fused_params)
    out = jax.tree_util.tree_map(jax.block_until_ready, out)

    ref = reference_forward(x, raw_params)
    for band in BAND_SIZES:
        assert out[band].shape == (B, 1, band), out[band].shape
        # Tolerance relaxed vs the pure-f32 check because MXU weights are bf16.
        assert jnp.allclose(out[band], ref[band], atol=2e-2, rtol=2e-2), (
            band, float(jnp.max(jnp.abs(out[band] - ref[band]))))

    print("KERNEL_OK")
</pallas_src>

<mosaic_0001>
module attributes {stable_mosaic.version = 11 : i64} {
  func.func @_decoder_kernel(%arg0: i32, %arg1: memref<8x16xf32, #tpu.memory_space<vmem>>, %arg2: memref<16x1536xbf16, #tpu.memory_space<vmem>>, %arg3: memref<1x1536xf32, #tpu.memory_space<vmem>>, %arg4: memref<1x1536xf32, #tpu.memory_space<vmem>>, %arg5: memref<1x256xf32, #tpu.memory_space<vmem>>, %arg6: memref<8x256xf32, #tpu.memory_space<vmem>>) attributes {dimension_semantics = [#tpu.dimension_semantics<parallel>], iteration_bounds = array<i64: 2>, scalar_prefetch = 0 : i64, scratch_operands = 0 : i64, tpu.core_type = #tpu.core_type<tc>, window_params = [{transform_indices = @transform_0, window_bounds = array<i64: 8, 16>}, {pipeline_mode = #tpu.pipeline_mode<synchronous>, transform_indices = @transform_1, window_bounds = array<i64: 16, 1536>}, {pipeline_mode = #tpu.pipeline_mode<synchronous>, transform_indices = @transform_2, window_bounds = array<i64: 1, 1536>}, {pipeline_mode = #tpu.pipeline_mode<synchronous>, transform_indices = @transform_3, window_bounds = array<i64: 1, 1536>}, {pipeline_mode = #tpu.pipeline_mode<synchronous>, transform_indices = @transform_4, window_bounds = array<i64: 1, 256>}, {transform_indices = @transform_5, window_bounds = array<i64: 8, 256>}]} {
    %c0 = arith.constant 0 : index
    %c0_0 = arith.constant 0 : index
    %0 = vector.load %arg1[%c0, %c0_0] : memref<8x16xf32, #tpu.memory_space<vmem>>, vector<8x16xf32>
    %1 = arith.truncf %0 : vector<8x16xf32> to vector<8x16xbf16>
    %c0_1 = arith.constant 0 : index
    %c0_2 = arith.constant 0 : index
    %2 = vector.load %arg2[%c0_1, %c0_2] : memref<16x1536xbf16, #tpu.memory_space<vmem>>, vector<16x1536xbf16>
    %cst = arith.constant dense<0.000000e+00> : vector<8x1536xf32>
    %3 = tpu.matmul %1, %2, %cst {dimension_numbers = #tpu.dot_dimension_numbers<[1], [0], [0], [1], [0, 0, 1, 1], [], []>} : vector<8x16xbf16>, vector<16x1536xbf16>, vector<8x1536xf32> -> vector<8x1536xf32>
    %c0_3 = arith.constant 0 : index
    %c0_4 = arith.constant 0 : index
    %4 = vector.load %arg3[%c0_3, %c0_4] : memref<1x1536xf32, #tpu.memory_space<vmem>>, vector<1x1536xf32>
    %5 = vector.broadcast %4 : vector<1x1536xf32> to vector<8x1536xf32>
    %6 = arith.addf %3, %5 : vector<8x1536xf32>
    %cst_5 = arith.constant 0.000000e+00 : f32
    %7 = vector.broadcast %cst_5 : f32 to vector<8x1536xf32>
    %8 = arith.cmpf ogt, %6, %7 : vector<8x1536xf32>
    %cst_6 = arith.constant 2.000000e-01 : f32
    %9 = vector.broadcast %cst_6 : f32 to vector<8x1536xf32>
    %10 = arith.mulf %9, %6 : vector<8x1536xf32>
    %11 = arith.select %8, %6, %10 : vector<8x1536xi1>, vector<8x1536xf32>
    %c0_7 = arith.constant 0 : index
    %c0_8 = arith.constant 0 : index
    %12 = vector.load %arg4[%c0_7, %c0_8] : memref<1x1536xf32, #tpu.memory_space<vmem>>, vector<1x1536xf32>
    %13 = vector.broadcast %12 : vector<1x1536xf32> to vector<8x1536xf32>
    %14 = arith.mulf %11, %13 : vector<8x1536xf32>
    %15 = vector.extract_strided_slice %14 {offsets = [0, 0], sizes = [8, 64], strides = [1, 1]} : vector<8x1536xf32> to vector<8x64xf32>
    %16 = vector.extract_strided_slice %14 {offsets = [0, 64], sizes = [8, 64], strides = [1, 1]} : vector<8x1536xf32> to vector<8x64xf32>
    %17 = arith.addf %15, %16 : vector<8x64xf32>
    %18 = vector.extract_strided_slice %14 {offsets = [0, 128], sizes = [8, 64], strides = [1, 1]} : vector<8x1536xf32> to vector<8x64xf32>
    %19 = arith.addf %17, %18 : vector<8x64xf32>
    %20 = vector.extract_strided_slice %14 {offsets = [0, 192], sizes = [8, 64], strides = [1, 1]} : vector<8x1536xf32> to vector<8x64xf32>
    %21 = arith.addf %19, %20 : vector<8x64xf32>
    %22 = vector.extract_strided_slice %14 {offsets = [0, 256], sizes = [8, 64], strides = [1, 1]} : vector<8x1536xf32> to vector<8x64xf32>
    %23 = arith.addf %21, %22 : vector<8x64xf32>
    %24 = vector.extract_strided_slice %14 {offsets = [0, 320], sizes = [8, 64], strides = [1, 1]} : vector<8x1536xf32> to vector<8x64xf32>
    %25 = arith.addf %23, %24 : vector<8x64xf32>
    %26 = vector.extract_strided_slice %14 {offsets = [0, 384], sizes = [8, 64], strides = [1, 1]} : vector<8x1536xf32> to vector<8x64xf32>
    %27 = arith.addf %25, %26 : vector<8x64xf32>
    %28 = vector.extract_strided_slice %14 {offsets = [0, 448], sizes = [8, 64], strides = [1, 1]} : vector<8x1536xf32> to vector<8x64xf32>
    %29 = arith.addf %27, %28 : vector<8x64xf32>
    %cst_9 = arith.constant 0.000000e+00 : f32
    %30 = vector.broadcast %cst_9 : f32 to vector<8x64xf32>
    %31 = vector.extract_strided_slice %14 {offsets = [0, 512], sizes = [8, 128], strides = [1, 1]} : vector<8x1536xf32> to vector<8x128xf32>
    %32 = vector.extract_strided_slice %14 {offsets = [0, 640], sizes = [8, 128], strides = [1, 1]} : vector<8x1536xf32> to vector<8x128xf32>
    %33 = arith.addf %31, %32 : vector<8x128xf32>
    %34 = vector.extract_strided_slice %14 {offsets = [0, 768], sizes = [8, 128], strides = [1, 1]} : vector<8x1536xf32> to vector<8x128xf32>
    %35 = arith.addf %33, %34 : vector<8x128xf32>
    %36 = vector.extract_strided_slice %14 {offsets = [0, 896], sizes = [8, 128], strides = [1, 1]} : vector<8x1536xf32> to vector<8x128xf32>
    %37 = arith.addf %35, %36 : vector<8x128xf32>
    %38 = vector.extract_strided_slice %14 {offsets = [0, 1024], sizes = [8, 128], strides = [1, 1]} : vector<8x1536xf32> to vector<8x128xf32>
    %39 = arith.addf %37, %38 : vector<8x128xf32>
    %40 = vector.extract_strided_slice %14 {offsets = [0, 1152], sizes = [8, 128], strides = [1, 1]} : vector<8x1536xf32> to vector<8x128xf32>
    %41 = arith.addf %39, %40 : vector<8x128xf32>
    %42 = vector.extract_strided_slice %14 {offsets = [0, 1280], sizes = [8, 128], strides = [1, 1]} : vector<8x1536xf32> to vector<8x128xf32>
    %43 = arith.addf %41, %42 : vector<8x128xf32>
    %44 = vector.extract_strided_slice %14 {offsets = [0, 1408], sizes = [8, 128], strides = [1, 1]} : vector<8x1536xf32> to vector<8x128xf32>
    %45 = arith.addf %43, %44 : vector<8x128xf32>
    %46 = tpu.concatenate %29, %30, %45 in 1 : vector<8x64xf32>, vector<8x64xf32>, vector<8x128xf32> -> vector<8x256xf32>
    %c0_10 = arith.constant 0 : index
    %c0_11 = arith.constant 0 : index
    %47 = vector.load %arg5[%c0_10, %c0_11] : memref<1x256xf32, #tpu.memory_space<vmem>>, vector<1x256xf32>
    %48 = vector.broadcast %47 : vector<1x256xf32> to vector<8x256xf32>
    %49 = arith.addf %46, %48 : vector<8x256xf32>
    %c0_12 = arith.constant 0 : index
    %c0_13 = arith.constant 0 : index
    %50 = vector.load %arg6[%c0_12, %c0_13] : memref<8x256xf32, #tpu.memory_space<vmem>>, vector<8x256xf32>
    tpu.vector_store %arg6[%c0_12, %c0_13], %49 {strides = array<i32>} : memref<8x256xf32, #tpu.memory_space<vmem>>, vector<8x256xf32>,
    return
  }
  func.func @transform_0(%arg0: i32) -> (i32, i32) {
    %c0_i32 = arith.constant 0 : i32
    %c0_i32_0 = arith.constant 0 : i32
    return %arg0, %c0_i32 : i32, i32
  }
  func.func @transform_1(%arg0: i32) -> (i32, i32) {
    %c0_i32 = arith.constant 0 : i32
    %c0_i32_0 = arith.constant 0 : i32
    %c0_i32_1 = arith.constant 0 : i32
    return %c0_i32, %c0_i32_0 : i32, i32
  }
  func.func @transform_2(%arg0: i32) -> (i32, i32) {
    %c0_i32 = arith.constant 0 : i32
    %c0_i32_0 = arith.constant 0 : i32
    %c0_i32_1 = arith.constant 0 : i32
    return %c0_i32, %c0_i32_0 : i32, i32
  }
  func.func @transform_3(%arg0: i32) -> (i32, i32) {
    %c0_i32 = arith.constant 0 : i32
    %c0_i32_0 = arith.constant 0 : i32
    %c0_i32_1 = arith.constant 0 : i32
    return %c0_i32, %c0_i32_0 : i32, i32
  }
  func.func @transform_4(%arg0: i32) -> (i32, i32) {
    %c0_i32 = arith.constant 0 : i32
    %c0_i32_0 = arith.constant 0 : i32
    %c0_i32_1 = arith.constant 0 : i32
    return %c0_i32, %c0_i32_0 : i32, i32
  }
  func.func @transform_5(%arg0: i32) -> (i32, i32) {
    %c0_i32 = arith.constant 0 : i32
    %c0_i32_0 = arith.constant 0 : i32
    return %arg0, %c0_i32 : i32, i32
  }
}

</mosaic_0001>

<llo_original>
// kernel: tpu_custom_call.1
$region0: #{tpu_custom_call.1}
  #allocation0 [shape = 'u32[]', space=smem, size = 0x4, offset = 0x4, fixed_abs, tag = 'smem constant byte address 0x4 - core index']
  #allocation1 [shape = 'u32[72,128]{1,0:T(1,128)}', space=vmem, size = 0x9000, scoped, tag = 'internal scratch']
  %s0 = inlined_call_operand.hbm [shape: f32[16,16], index: 0, kind: input, shape index: {}]
  %s1 = inlined_call_operand.hbm [shape: bf16[16,1536], index: 1, kind: input, shape index: {}]
  %s2 = inlined_call_operand.hbm [shape: f32[1,1536], index: 2, kind: input, shape index: {}]
  %s3 = inlined_call_operand.hbm [shape: f32[1,1536], index: 3, kind: input, shape index: {}]
  %s4 = inlined_call_operand.vmem [shape: f32[1,256], index: 4, kind: input, shape index: {}]
  %s5 = inlined_call_operand.hbm [shape: f32[16,256], index: 5, kind: output, shape index: {}]
  %s6 = sld [smem:[#allocation0]]
  $region69: #{tpu_custom_call.1} parent=0
    _
  %s8 = ssub.s32 1, %s6
  %s9 = scalar_select 0, %s8, %s6
  $region1: #{tpu_custom_call.1} parent=0
    #allocation2 [shape = 'u8[8192]{0}', space=vmem, size = 0x2000, scoped, tag = 'input window, operand 0']
    #allocation3 [shape = 's32[2]{0}', space=sflag, size = 0x8, scoped, tag = 'scoped memory for tpu_custom_call.1']
    #allocation4 [shape = 's32[2]{0}', space=sflag, size = 0x8, scoped, tag = 'scoped memory for tpu_custom_call.1']
    #allocation5 [shape = 'u8[49152]{0}', space=vmem, size = 0xc000, scoped, tag = 'input window, operand 1, single buffered']
    #allocation6 [shape = 's32[1]{0}', space=sflag, size = 0x4, scoped, tag = 'scoped memory for tpu_custom_call.1']
    #allocation7 [shape = 'u8[6144]{0}', space=vmem, size = 0x1800, scoped, tag = 'input window, operand 2, single buffered']
    #allocation8 [shape = 'u8[6144]{0}', space=vmem, size = 0x1800, scoped, tag = 'input window, operand 3, single buffered']
    #allocation9 [shape = 's32[1]{0}', space=sflag, size = 0x4, scoped, tag = 'scoped memory for tpu_custom_call.1']
    #allocation10 [shape = 'u8[16384]{0}', space=vmem, size = 0x4000, scoped, tag = 'output window, operand 0']
    %10 = vsyncpa [#allocation3], 0
    %s11 = scalar_lea.sflag [#allocation3], 1
    %12 = vsyncpa %s11, 0
    %13 = vsyncpa [#allocation6], 0
    %14 = vsyncpa [#allocation9], 0
    %15 = vsyncpa [#allocation4], 0
    %s16 = scalar_lea.sflag [#allocation4], 1
    %17 = vsyncpa %s16, 0
    loop: start=0, step=1, limit=4
    $region2: #{tpu_custom_call.1} parent=1 // loop_pre_header
      _
    $region3: #{tpu_custom_call.1} parent=1 // loop_header
      %s19 = sphi 0, %s23
      %p20 = scmp.ge.s32.totalorder %s19, 4
      %s29 = sphi 0, %s31
      %s32 = sphi 0, %s29
      %s33 = sphi 0, %s32
      %s49 = sphi 0, %s33
      %s53 = sphi 0, %s53
      %s55 = sphi 0, %s53
      %s56 = sphi 0, %s55
      %s70 = sphi 0, %s56
      %s74 = sphi 0, %s74
      %s76 = sphi 0, %s74
      %s77 = sphi 0, %s76
      %s91 = sphi 0, %s77
      %s95 = sphi 0, %s95
      %s97 = sphi 0, %s95
      %s98 = sphi 0, %s97
      %s112 = sphi 0, %s98
      %s116 = sphi 0, %s116
      %s118 = sphi 0, %s116
      %s119 = sphi 0, %s118
      %s133 = sphi 0, %s119
      %s139 = sphi 0, %s141
      %s142 = sphi 0, %s139
      %s143 = sphi 0, %s142
      %s159 = sphi 0, %s143
    $region4: #{tpu_custom_call.1} parent=1 // loop_header_branch
      %22 = sbr.rel (%p20) target = $region8
    $region5: #{tpu_custom_call.1} parent=1 // loop_body
      %s24 = ssub.s32 %s19, 1
      %s25 = ssub.s32 %s19, 2
      %s26 = sadd.s32 %s19, 1
      %s27 = ssub.s32 %s19, %s26
      %p28 = scmp.eq.s32.totalorder %s27, 0
      %s30 = sadd.s32 %s29, 1
      %s31 = scalar_select %p28, %s29, %s30
      %p34 = pneg %p28
      %p35 = scmp.eq.s32.totalorder %s19, 1
      %p36 = por %p34, %p35
      %p37 = scmp.ne.s32.totalorder %s29, %s32
      %p38 = scmp.eq.s32.totalorder %s19, 0
      %p39 = por %p37, %p38
      %p40 = scmp.ne.s32.totalorder %s29, %s32
      %p41 = scmp.eq.s32.totalorder %s24, 1
      %p42 = por %p40, %p41
      %p43 = scmp.ne.s32.totalorder %s32, %s33
      %p44 = scmp.eq.s32.totalorder %s24, 0
      %p45 = por %p43, %p44
      %p46 = scmp.ne.s32.totalorder %s32, %s33
      %p47 = scmp.eq.s32.totalorder %s25, 1
      %p48 = por %p46, %p47
      %p50 = scmp.ne.s32.totalorder %s33, %s49
      %p51 = scmp.eq.s32.totalorder %s25, 0
      %p52 = por %p50, %p51
      %s54 = sadd.s32 %s53, 1
      %p57 = scmp.eq.s32.totalorder %s19, 1
      %p58 = scmp.ne.s32.totalorder %s53, %s55
      %p59 = scmp.eq.s32.totalorder %s19, 0
      %p60 = por %p58, %p59
      %p61 = scmp.ne.s32.totalorder %s53, %s55
      %p62 = scmp.eq.s32.totalorder %s24, 1
      %p63 = por %p61, %p62
      %p64 = scmp.ne.s32.totalorder %s55, %s56
      %p65 = scmp.eq.s32.totalorder %s24, 0
      %p66 = por %p64, %p65
      %p67 = scmp.ne.s32.totalorder %s55, %s56
      %p68 = scmp.eq.s32.totalorder %s25, 1
      %p69 = por %p67, %p68
      %p71 = scmp.ne.s32.totalorder %s56, %s70
      %p72 = scmp.eq.s32.totalorder %s25, 0
      %p73 = por %p71, %p72
      %s75 = sadd.s32 %s74, 1
      %p78 = scmp.eq.s32.totalorder %s19, 1
      %p79 = scmp.ne.s32.totalorder %s74, %s76
      %p80 = scmp.eq.s32.totalorder %s19, 0
      %p81 = por %p79, %p80
      %p82 = scmp.ne.s32.totalorder %s74, %s76
      %p83 = scmp.eq.s32.totalorder %s24, 1
      %p84 = por %p82, %p83
      %p85 = scmp.ne.s32.totalorder %s76, %s77
      %p86 = scmp.eq.s32.totalorder %s24, 0
      %p87 = por %p85, %p86
      %p88 = scmp.ne.s32.totalorder %s76, %s77
      %p89 = scmp.eq.s32.totalorder %s25, 1
      %p90 = por %p88, %p89
      %p92 = scmp.ne.s32.totalorder %s77, %s91
      %p93 = scmp.eq.s32.totalorder %s25, 0
      %p94 = por %p92, %p93
      %s96 = sadd.s32 %s95, 1
      %p99 = scmp.eq.s32.totalorder %s19, 1
      %p100 = scmp.ne.s32.totalorder %s95, %s97
      %p101 = scmp.eq.s32.totalorder %s19, 0
      %p102 = por %p100, %p101
      %p103 = scmp.ne.s32.totalorder %s95, %s97
      %p104 = scmp.eq.s32.totalorder %s24, 1
      %p105 = por %p103, %p104
      %p106 = scmp.ne.s32.totalorder %s97, %s98
      %p107 = scmp.eq.s32.totalorder %s24, 0
      %p108 = por %p106, %p107
      %p109 = scmp.ne.s32.totalorder %s97, %s98
      %p110 = scmp.eq.s32.totalorder %s25, 1
      %p111 = por %p109, %p110
      %p113 = scmp.ne.s32.totalorder %s98, %s112
      %p114 = scmp.eq.s32.totalorder %s25, 0
      %p115 = por %p113, %p114
      %s117 = sadd.s32 %s116, 1
      %p120 = scmp.eq.s32.totalorder %s19, 1
      %p121 = scmp.ne.s32.totalorder %s116, %s118
      %p122 = scmp.eq.s32.totalorder %s19, 0
      %p123 = por %p121, %p122
      %p124 = scmp.ne.s32.totalorder %s116, %s118
      %p125 = scmp.eq.s32.totalorder %s24, 1
      %p126 = por %p124, %p125
      %p127 = scmp.ne.s32.totalorder %s118, %s119
      %p128 = scmp.eq.s32.totalorder %s24, 0
      %p129 = por %p127, %p128
      %p130 = scmp.ne.s32.totalorder %s118, %s119
      %p131 = scmp.eq.s32.totalorder %s25, 1
      %p132 = por %p130, %p131
      %p134 = scmp.ne.s32.totalorder %s119, %s133
      %p135 = scmp.eq.s32.totalorder %s25, 0
      %p136 = por %p134, %p135
      %s137 = ssub.s32 %s19, %s26
      %p138 = scmp.eq.s32.totalorder %s137, 0
      %s140 = sadd.s32 %s139, 1
      %s141 = scalar_select %p138, %s139, %s140
      %p144 = pneg %p138
      %p145 = scmp.eq.s32.totalorder %s19, 1
      %p146 = por %p144, %p145
      %p147 = scmp.ne.s32.totalorder %s139, %s142
      %p148 = scmp.eq.s32.totalorder %s19, 0
      %p149 = por %p147, %p148
      %p150 = scmp.ne.s32.totalorder %s139, %s142
      %p151 = scmp.eq.s32.totalorder %s24, 1
      %p152 = por %p150, %p151
      %p153 = scmp.ne.s32.totalorder %s142, %s143
      %p154 = scmp.eq.s32.totalorder %s24, 0
      %p155 = por %p153, %p154
      %p156 = scmp.ne.s32.totalorder %s142, %s143
      %p157 = scmp.eq.s32.totalorder %s25, 1
      %p158 = por %p156, %p157
      %p160 = scmp.ne.s32.totalorder %s143, %s159
      %p161 = scmp.eq.s32.totalorder %s25, 0
      %p162 = por %p160, %p161
      %p163 = scmp.le.s32.totalorder 1, %s19
      %p164 = scmp.lt.s32.totalorder %s19, 3
      %p165 = pnand %p163, %p164
      %p166 = pneg %p165
      // Predicated region
      $region9: #{tpu_custom_call.1} parent=5 // pred_check
        _
      $region10: #{tpu_custom_call.1} parent=5 // pred_check_branch
        %168 = sbr.rel (%p165) target = $region12
      $region11: #{tpu_custom_call.1} parent=5 // pred_region
        %s169 = ssub.s32 %s19, 1
        // Predicated region
        $region13: #{tpu_custom_call.1} parent=11 // pred_check
          %p170 = pneg %p66
        $region14: #{tpu_custom_call.1} parent=11 // pred_check_branch
          %172 = sbr.rel (%p170) target = $region16
        $region15: #{tpu_custom_call.1} parent=11 // pred_region
          %174 = vsyncadd [#allocation6], 0
          %s175 = sshll.u32 %s1, 4
          %s176 = int_to_ptr.hbm [resolvable:$true] %s175
          %s177 = sshll.u32 [#allocation5], 4
          %s178 = int_to_ptr.vmem [resolvable:$true] %s177
          %183 = dma.hbm_to_vmem [thread:$0]  %s176, 1536, %s178, [#allocation6], 768, 768, 48
        $region16: #{tpu_custom_call.1} parent=11 // pred_fallthru
          _
        // Predicated region
        $region17: #{tpu_custom_call.1} parent=11 // pred_check
          %p184 = pneg %p87
        $region18: #{tpu_custom_call.1} parent=11 // pred_check_branch
          %186 = sbr.rel (%p184) target = $region20
        $region19: #{tpu_custom_call.1} parent=11 // pred_region
          %188 = vsyncadd [#allocation6], 0
          %s190 = sshll.u32 %s2, 4
          %s191 = int_to_ptr.hbm [resolvable:$true] %s190
          %s192 = sshll.u32 [#allocation7], 4
          %s193 = int_to_ptr.vmem [resolvable:$true] %s192
          %195 = dma.hbm_to_vmem [thread:$0]  %s191, 192, %s193, [#allocation6]
        $region20: #{tpu_custom_call.1} parent=11 // pred_fallthru
          _
        // Predicated region
        $region21: #{tpu_custom_call.1} parent=11 // pred_check
          %p196 = pneg %p108
        $region22: #{tpu_custom_call.1} parent=11 // pred_check_branch
          %198 = sbr.rel (%p196) target = $region24
        $region23: #{tpu_custom_call.1} parent=11 // pred_region
          %200 = vsyncadd [#allocation9], 0
          %s202 = sshll.u32 %s3, 4
          %s203 = int_to_ptr.hbm [resolvable:$true] %s202
          %s204 = sshll.u32 [#allocation8], 4
          %s205 = int_to_ptr.vmem [resolvable:$true] %s204
          %207 = dma.hbm_to_vmem [thread:$0]  %s203, 192, %s205, [#allocation9]
        $region24: #{tpu_custom_call.1} parent=11 // pred_fallthru
          _
        // Predicated region
        $region25: #{tpu_custom_call.1} parent=11 // pred_check
          %p208 = pneg %p129
        $region26: #{tpu_custom_call.1} parent=11 // pred_check_branch
          %210 = sbr.rel (%p208) target = $region28
        $region27: #{tpu_custom_call.1} parent=11 // pred_region
          _
        $region28: #{tpu_custom_call.1} parent=11 // pred_fallthru
          _
      $region12: #{tpu_custom_call.1} parent=5 // pred_fallthru
        _
      %p211 = scmp.lt.s32.totalorder %s19, 2
      // Predicated region
      $region29: #{tpu_custom_call.1} parent=5 // pred_check
        %p212 = pneg %p211
      $region30: #{tpu_custom_call.1} parent=5 // pred_check_branch
        %214 = sbr.rel (%p212) target = $region32
      $region31: #{tpu_custom_call.1} parent=5 // pred_region
        // Predicated region
        $region33: #{tpu_custom_call.1} parent=31 // pred_check
          %p215 = pneg %p39
        $region34: #{tpu_custom_call.1} parent=31 // pred_check_branch
          %217 = sbr.rel (%p215) target = $region36
        $region35: #{tpu_custom_call.1} parent=31 // pred_region
          %s218 = sand.u32 %s29, 1
          %s219 = scalar_lea.sflag [#allocation3], %s218
          %s220 = sand.u32 %s29, 1
          %s221 = smul.addr %s220, 8
          %s222 = scalar_lea.vmem [#allocation2], %s221
          %224 = vsyncadd %s219, 0
          %s225 = smul.addr %s19, 8
          %s226 = scalar_lea.hbm %s0, %s225
          %s228 = sshll.u32 %s226, 4
          %s229 = int_to_ptr.hbm [resolvable:$true] %s228
          %s230 = sshll.u32 %s222, 4
          %s231 = int_to_ptr.vmem [resolvable:$true] %s230
          %233 = dma.hbm_to_vmem [thread:$0]  %s229, 128, %s231, %s219
        $region36: #{tpu_custom_call.1} parent=31 // pred_fallthru
          _
      $region32: #{tpu_custom_call.1} parent=5 // pred_fallthru
        _
      %p234 = scmp.le.s32.totalorder 1, %s19
      %p235 = scmp.lt.s32.totalorder %s19, 3
      %p236 = pnand %p234, %p235
      %p237 = pneg %p236
      // Predicated region
      $region37: #{tpu_custom_call.1} parent=5 // pred_check
        _
      $region38: #{tpu_custom_call.1} parent=5 // pred_check_branch
        %239 = sbr.rel (%p236) target = $region40
      $region39: #{tpu_custom_call.1} parent=5 // pred_region
        %s240 = ssub.s32 %s19, 1
        %s241 = sand.u32 %s32, 1
        %s242 = scalar_lea.sflag [#allocation3], %s241
        %s243 = sand.u32 %s32, 1
        %s244 = smul.addr %s243, 8
        %s245 = scalar_lea.vmem [#allocation2], %s244
        // Predicated region
        $region41: #{tpu_custom_call.1} parent=39 // pred_check
          %p246 = pneg %p45
        $region42: #{tpu_custom_call.1} parent=39 // pred_check_branch
          %248 = sbr.rel (%p246) target = $region44
        $region43: #{tpu_custom_call.1} parent=39 // pred_region
          %250 = dma.done %s242, 128
        $region44: #{tpu_custom_call.1} parent=39 // pred_fallthru
          _
        // Predicated region
        $region45: #{tpu_custom_call.1} parent=39 // pred_check
          %p251 = pneg %p66
        $region46: #{tpu_custom_call.1} parent=39 // pred_check_branch
          %253 = sbr.rel (%p251) target = $region48
        $region47: #{tpu_custom_call.1} parent=39 // pred_region
          %255 = dma.done [#allocation6], 1536
        $region48: #{tpu_custom_call.1} parent=39 // pred_fallthru
          _
        // Predicated region
        $region49: #{tpu_custom_call.1} parent=39 // pred_check
          %p256 = pneg %p87
        $region50: #{tpu_custom_call.1} parent=39 // pred_check_branch
          %258 = sbr.rel (%p256) target = $region52
        $region51: #{tpu_custom_call.1} parent=39 // pred_region
          %260 = dma.done [#allocation6], 192
        $region52: #{tpu_custom_call.1} parent=39 // pred_fallthru
          _
        // Predicated region
        $region53: #{tpu_custom_call.1} parent=39 // pred_check
          %p261 = pneg %p108
        $region54: #{tpu_custom_call.1} parent=39 // pred_check_branch
          %263 = sbr.rel (%p261) target = $region56
        $region55: #{tpu_custom_call.1} parent=39 // pred_region
          %265 = dma.done [#allocation9], 192
        $region56: #{tpu_custom_call.1} parent=39 // pred_fallthru
          _
        %s266 = sand.u32 %s32, 1
        %s267 = scalar_lea.sflag [#allocation3], %s266
        %s268 = sand.u32 %s32, 1
        %s269 = smul.addr %s268, 8
        %s270 = scalar_lea.vmem [#allocation2], %s269
        %p271 = pneg %p45
        %p272 = pneg %p42
        %p273 = pneg %p66
        %p274 = pneg %p63
        %p275 = pneg %p87
        %p276 = pneg %p84
        %p277 = pneg %p108
        %p278 = pneg %p105
        %p279 = pneg %p129
        %p280 = pneg %p126
        %p281 = pneg %p155
        %p282 = pneg %p152
        %s283 = sand.u32 %s142, 1
        %s284 = scalar_lea.sflag [#allocation4], %s283
        %s285 = sand.u32 %s142, 1
        %s286 = smul.addr %s285, 16
        %s287 = scalar_lea.vmem [#allocation10], %s286
        %v289 = vld [vmem:[%s245] sm:$0xff]
        %v290 = vpack.c.bf16 %v289, %v289
        %v291 = vld [vmem:[#allocation5] sm:$0xff]
        %v292 = vld [vmem:[#allocation5 + $0x8] sm:$0xff]
        %v293 = vld [vmem:[#allocation5 + $0x10] sm:$0xff]
        %v294 = vld [vmem:[#allocation5 + $0x18] sm:$0xff]
        %v295 = vld [vmem:[#allocation5 + $0x20] sm:$0xff]
        %v296 = vld [vmem:[#allocation5 + $0x28] sm:$0xff]
        %v297 = vld [vmem:[#allocation5 + $0x30] sm:$0xff]
        %v298 = vld [vmem:[#allocation5 + $0x38] sm:$0xff]
        %v299 = vld [vmem:[#allocation5 + $0x40] sm:$0xff]
        %v300 = vld [vmem:[#allocation5 + $0x48] sm:$0xff]
        %v301 = vld [vmem:[#allocation5 + $0x50] sm:$0xff]
        %v302 = vld [vmem:[#allocation5 + $0x58] sm:$0xff]
        %v303 = vld [vmem:[#allocation7] sm:$0xff]
        %v304 = vld [vmem:[#allocation7 + $0x8] sm:$0xf]
        %v307 = vperm.slane %v303, 0
        %v308 = vperm.slane %v303, 1
        %v309 = vperm.slane %v303, 2
        %v310 = vperm.slane %v303, 3
        %v311 = vperm.slane %v303, 4
        %v312 = vperm.slane %v303, 5
        %v313 = vperm.slane %v303, 6
        %v314 = vperm.slane %v303, 7
        %v315 = vperm.slane %v304, 0
        %v316 = vperm.slane %v304, 1
        %v317 = vperm.slane %v304, 2
        %v318 = vperm.slane %v304, 3
        %v343 = vunpack.c.l.b16 %v291
        %v344 = vunpack.c.h.b16 %v291
        %v345 = vunpack.c.l.b16 %v292
        %v346 = vunpack.c.h.b16 %v292
        %v347 = vunpack.c.l.b16 %v293
        %v348 = vunpack.c.h.b16 %v293
        %v349 = vunpack.c.l.b16 %v294
        %v350 = vunpack.c.h.b16 %v294
        %v351 = vunpack.c.l.b16 %v295
        %v352 = vunpack.c.h.b16 %v295
        %v353 = vunpack.c.l.b16 %v296
        %v354 = vunpack.c.h.b16 %v296
        %v355 = vunpack.c.l.b16 %v297
        %v356 = vunpack.c.h.b16 %v297
        %v357 = vunpack.c.l.b16 %v298
        %v358 = vunpack.c.h.b16 %v298
        %v359 = vunpack.c.l.b16 %v299
        %v360 = vunpack.c.h.b16 %v299
        %v361 = vunpack.c.l.b16 %v300
        %v362 = vunpack.c.h.b16 %v300
        %v363 = vunpack.c.l.b16 %v301
        %v364 = vunpack.c.h.b16 %v301
        %v365 = vunpack.c.l.b16 %v302
        %v366 = vunpack.c.h.b16 %v302
        %v367 = vpack.c.b16 %v355, %v343
        %v368 = vpack.c.b16 %v356, %v344
        %v369 = vpack.c.b16 %v357, %v345
        %v370 = vpack.c.b16 %v358, %v346
        %v371 = vpack.c.b16 %v359, %v347
        %v372 = vpack.c.b16 %v360, %v348
        %v373 = vpack.c.b16 %v361, %v349
        %v374 = vpack.c.b16 %v362, %v350
        %v375 = vpack.c.b16 %v363, %v351
        %v376 = vpack.c.b16 %v364, %v352
        %v377 = vpack.c.b16 %v365, %v353
        %v378 = vpack.c.b16 %v366, %v354
        %vm391 = vcmask 130048
        %v393 = vsel %vm391, %v290, 0
        %395 = vmatpush.bf16.msra.mxu0 0
        %396 = vmatpush.bf16.msra.mxu0 0
        %397 = vmatpush.bf16.msra.mxu0 0
        %398 = vmatpush.bf16.msra.mxu0 0
        %399 = vmatpush.bf16.msra.mxu0 0
        %400 = vmatpush.bf16.msra.mxu0 0
        %401 = vmatpush.bf16.msra.mxu0 0
        %402 = vmatpush.bf16.msra.mxu0 %v367
        %403 = vmatmul.bf16.gmra.mxu0 %v393
        %v404 = vpop.f32.mrf.mxu0
        %v405 = vadd.f32 %v307, %v404
        %v406 = vpop.f32.mrf.mxu0
        %407 = vdwg.mxu0
        %408 = vmatpush.bf16.msra.mxu0 0
        %409 = vmatpush.bf16.msra.mxu0 0
        %410 = vmatpush.bf16.msra.mxu0 0
        %411 = vmatpush.bf16.msra.mxu0 0
        %412 = vmatpush.bf16.msra.mxu0 0
        %413 = vmatpush.bf16.msra.mxu0 0
        %414 = vmatpush.bf16.msra.mxu0 0
        %415 = vmatpush.bf16.msra.mxu0 %v368
        %416 = vmatmul.bf16.gmra.mxu0 %v393
        %v417 = vpop.f32.mrf.mxu0
        %v418 = vadd.f32 %v308, %v417
        %v419 = vpop.f32.mrf.mxu0
        %420 = vdwg.mxu0
        %421 = vmatpush.bf16.msra.mxu0 0
        %422 = vmatpush.bf16.msra.mxu0 0
        %423 = vmatpush.bf16.msra.mxu0 0
        %424 = vmatpush.bf16.msra.mxu0 0
        %425 = vmatpush.bf16.msra.mxu0 0
        %426 = vmatpush.bf16.msra.mxu0 0
        %427 = vmatpush.bf16.msra.mxu0 0
        %428 = vmatpush.bf16.msra.mxu0 %v369
        %429 = vmatmul.bf16.gmra.mxu0 %v393
        %v430 = vpop.f32.mrf.mxu0
        %v431 = vadd.f32 %v309, %v430
        %v432 = vpop.f32.mrf.mxu0
        %433 = vdwg.mxu0
        %434 = vmatpush.bf16.msra.mxu0 0
        %435 = vmatpush.bf16.msra.mxu0 0
        %436 = vmatpush.bf16.msra.mxu0 0
        %437 = vmatpush.bf16.msra.mxu0 0
        %438 = vmatpush.bf16.msra.mxu0 0
        %439 = vmatpush.bf16.msra.mxu0 0
        %440 = vmatpush.bf16.msra.mxu0 0
        %441 = vmatpush.bf16.msra.mxu0 %v370
        %442 = vmatmul.bf16.gmra.mxu0 %v393
        %v443 = vpop.f32.mrf.mxu0
        %v444 = vadd.f32 %v310, %v443
        %v445 = vpop.f32.mrf.mxu0
        %446 = vdwg.mxu0
        %447 = vmatpush.bf16.msra.mxu0 0
        %448 = vmatpush.bf16.msra.mxu0 0
        %449 = vmatpush.bf16.msra.mxu0 0
        %450 = vmatpush.bf16.msra.mxu0 0
        %451 = vmatpush.bf16.msra.mxu0 0
        %452 = vmatpush.bf16.msra.mxu0 0
        %453 = vmatpush.bf16.msra.mxu0 0
        %454 = vmatpush.bf16.msra.mxu0 %v371
        %455 = vmatmul.bf16.gmra.mxu0 %v393
        %v456 = vpop.f32.mrf.mxu0
        %v457 = vadd.f32 %v311, %v456
        %v458 = vpop.f32.mrf.mxu0
        %459 = vdwg.mxu0
        %460 = vmatpush.bf16.msra.mxu0 0
        %461 = vmatpush.bf16.msra.mxu0 0
        %462 = vmatpush.bf16.msra.mxu0 0
        %463 = vmatpush.bf16.msra.mxu0 0
        %464 = vmatpush.bf16.msra.mxu0 0
        %465 = vmatpush.bf16.msra.mxu0 0
        %466 = vmatpush.bf16.msra.mxu0 0
        %467 = vmatpush.bf16.msra.mxu0 %v372
        %468 = vmatmul.bf16.gmra.mxu0 %v393
        %v469 = vpop.f32.mrf.mxu0
        %v470 = vadd.f32 %v312, %v469
        %v471 = vpop.f32.mrf.mxu0
        %472 = vdwg.mxu0
        %473 = vmatpush.bf16.msra.mxu0 0
        %474 = vmatpush.bf16.msra.mxu0 0
        %475 = vmatpush.bf16.msra.mxu0 0
        %476 = vmatpush.bf16.msra.mxu0 0
        %477 = vmatpush.bf16.msra.mxu0 0
        %478 = vmatpush.bf16.msra.mxu0 0
        %479 = vmatpush.bf16.msra.mxu0 0
        %480 = vmatpush.bf16.msra.mxu0 %v373
        %481 = vmatmul.bf16.gmra.mxu0 %v393
        %v482 = vpop.f32.mrf.mxu0
        %v483 = vadd.f32 %v313, %v482
        %v484 = vpop.f32.mrf.mxu0
        %485 = vdwg.mxu0
        %486 = vmatpush.bf16.msra.mxu0 0
        %487 = vmatpush.bf16.msra.mxu0 0
        %488 = vmatpush.bf16.msra.mxu0 0
        %489 = vmatpush.bf16.msra.mxu0 0
        %490 = vmatpush.bf16.msra.mxu0 0
        %491 = vmatpush.bf16.msra.mxu0 0
        %492 = vmatpush.bf16.msra.mxu0 0
        %493 = vmatpush.bf16.msra.mxu0 %v374
        %494 = vmatmul.bf16.gmra.mxu0 %v393
        %v495 = vpop.f32.mrf.mxu0
        %v496 = vadd.f32 %v314, %v495
        %v497 = vpop.f32.mrf.mxu0
        %498 = vdwg.mxu0
        %499 = vmatpush.bf16.msra.mxu0 0
        %500 = vmatpush.bf16.msra.mxu0 0
        %501 = vmatpush.bf16.msra.mxu0 0
        %502 = vmatpush.bf16.msra.mxu0 0
        %503 = vmatpush.bf16.msra.mxu0 0
        %504 = vmatpush.bf16.msra.mxu0 0
        %505 = vmatpush.bf16.msra.mxu0 0
        %506 = vmatpush.bf16.msra.mxu0 %v375
        %507 = vmatmul.bf16.gmra.mxu0 %v393
        %v508 = vpop.f32.mrf.mxu0
        %v509 = vadd.f32 %v315, %v508
        %v510 = vpop.f32.mrf.mxu0
        %511 = vdwg.mxu0
        %512 = vmatpush.bf16.msra.mxu0 0
        %513 = vmatpush.bf16.msra.mxu0 0
        %514 = vmatpush.bf16.msra.mxu0 0
        %515 = vmatpush.bf16.msra.mxu0 0
        %516 = vmatpush.bf16.msra.mxu0 0
        %517 = vmatpush.bf16.msra.mxu0 0
        %518 = vmatpush.bf16.msra.mxu0 0
        %519 = vmatpush.bf16.msra.mxu0 %v376
        %520 = vmatmul.bf16.gmra.mxu0 %v393
        %v521 = vpop.f32.mrf.mxu0
        %v522 = vadd.f32 %v316, %v521
        %v523 = vpop.f32.mrf.mxu0
        %524 = vdwg.mxu0
        %525 = vmatpush.bf16.msra.mxu0 0
        %526 = vmatpush.bf16.msra.mxu0 0
        %527 = vmatpush.bf16.msra.mxu0 0
        %528 = vmatpush.bf16.msra.mxu0 0
        %529 = vmatpush.bf16.msra.mxu0 0
        %530 = vmatpush.bf16.msra.mxu0 0
        %531 = vmatpush.bf16.msra.mxu0 0
        %532 = vmatpush.bf16.msra.mxu0 %v377
        %533 = vmatmul.bf16.gmra.mxu0 %v393
        %v534 = vpop.f32.mrf.mxu0
        %v535 = vadd.f32 %v317, %v534
        %v536 = vpop.f32.mrf.mxu0
        %537 = vdwg.mxu0
        %538 = vmatpush.bf16.msra.mxu0 0
        %539 = vmatpush.bf16.msra.mxu0 0
        %540 = vmatpush.bf16.msra.mxu0 0
        %541 = vmatpush.bf16.msra.mxu0 0
        %542 = vmatpush.bf16.msra.mxu0 0
        %543 = vmatpush.bf16.msra.mxu0 0
        %544 = vmatpush.bf16.msra.mxu0 0
        %545 = vmatpush.bf16.msra.mxu0 %v378
        %546 = vmatmul.bf16.gmra.mxu0 %v393
        %v547 = vpop.f32.mrf.mxu0
        %v548 = vadd.f32 %v318, %v547
        %v549 = vpop.f32.mrf.mxu0
        %550 = vdwg.mxu0
        %vm551 = vcmp.gt.f32.partialorder %v405, 0.0
        %vm552 = vcmp.gt.f32.partialorder %v418, 0.0
        %vm553 = vcmp.gt.f32.partialorder %v431, 0.0
        %vm554 = vcmp.gt.f32.partialorder %v444, 0.0
        %vm555 = vcmp.gt.f32.partialorder %v457, 0.0
        %vm556 = vcmp.gt.f32.partialorder %v470, 0.0
        %vm557 = vcmp.gt.f32.partialorder %v483, 0.0
        %vm558 = vcmp.gt.f32.partialorder %v496, 0.0
        %vm559 = vcmp.gt.f32.partialorder %v509, 0.0
        %vm560 = vcmp.gt.f32.partialorder %v522, 0.0
        %vm561 = vcmp.gt.f32.partialorder %v535, 0.0
        %vm562 = vcmp.gt.f32.partialorder %v548, 0.0
        %v563 = vmul.f32 %v405, 0.2
        %v564 = vmul.f32 %v418, 0.2
        %v565 = vmul.f32 %v431, 0.2
        %v566 = vmul.f32 %v444, 0.2
        %v567 = vmul.f32 %v457, 0.2
        %v568 = vmul.f32 %v470, 0.2
        %v569 = vmul.f32 %v483, 0.2
        %v570 = vmul.f32 %v496, 0.2
        %v571 = vmul.f32 %v509, 0.2
        %v572 = vmul.f32 %v522, 0.2
        %v573 = vmul.f32 %v535, 0.2
        %v574 = vmul.f32 %v548, 0.2
        %v575 = vsel %vm551, %v405, %v563
        %v576 = vsel %vm552, %v418, %v564
        %v577 = vsel %vm553, %v431, %v565
        %v578 = vsel %vm554, %v444, %v566
        %v579 = vsel %vm555, %v457, %v567
        %v580 = vsel %vm556, %v470, %v568
        %v581 = vsel %vm557, %v483, %v569
        %v582 = vsel %vm558, %v496, %v570
        %v583 = vsel %vm559, %v509, %v571
        %v584 = vsel %vm560, %v522, %v572
        %v585 = vsel %vm561, %v535, %v573
        %v586 = vsel %vm562, %v548, %v574
        %v587 = vld [vmem:[#allocation8] sm:$0xff]
        %v588 = vld [vmem:[#allocation8 + $0x8] sm:$0xf]
        %v591 = vperm.slane %v587, 0
        %v592 = vperm.slane %v587, 1
        %v593 = vperm.slane %v587, 2
        %v594 = vperm.slane %v587, 3
        %v595 = vperm.slane %v587, 4
        %v596 = vperm.slane %v587, 5
        %v597 = vperm.slane %v587, 6
        %v598 = vperm.slane %v587, 7
        %v599 = vperm.slane %v588, 0
        %v600 = vperm.slane %v588, 1
        %v601 = vperm.slane %v588, 2
        %v602 = vperm.slane %v588, 3
        %v615 = vmul.f32 %v575, %v591
        %v616 = vmul.f32 %v576, %v592
        %v617 = vmul.f32 %v577, %v593
        %v618 = vmul.f32 %v578, %v594
        %v619 = vmul.f32 %v579, %v595
        %v620 = vmul.f32 %v580, %v596
        %v621 = vmul.f32 %v581, %v597
        %v622 = vmul.f32 %v582, %v598
        %v623 = vmul.f32 %v583, %v599
        %v624 = vmul.f32 %v584, %v600
        %v625 = vmul.f32 %v585, %v601
        %v626 = vmul.f32 %v586, %v602
        %628 = vrot.lane.b32.xlu0 %v615, 64
        %v629 = vpop.permute.xlu0 %628
        %v631 = vadd.f32 %v615, %v629
        %v632 = vadd.f32 %v631, %v616
        %634 = vrot.lane.b32.xlu0 %v616, 64
        %v635 = vpop.permute.xlu0 %634
        %v637 = vadd.f32 %v632, %v635
        %v638 = vadd.f32 %v637, %v617
        %640 = vrot.lane.b32.xlu0 %v617, 64
        %v641 = vpop.permute.xlu0 %640
        %v643 = vadd.f32 %v638, %v641
        %v644 = vadd.f32 %v643, %v618
        %646 = vrot.lane.b32.xlu0 %v618, 64
        %v647 = vpop.permute.xlu0 %646
        %v649 = vadd.f32 %v644, %v647
        %v650 = vadd.f32 %v619, %v620
        %v651 = vadd.f32 %v650, %v621
        %v652 = vadd.f32 %v651, %v622
        %v653 = vadd.f32 %v652, %v623
        %v654 = vadd.f32 %v653, %v624
        %v655 = vadd.f32 %v654, %v625
        %v656 = vadd.f32 %v655, %v626
        %vm657 = vcmask 523264
        %v658 = vsel %vm657, %v649, 0.0
        %v659 = vld [vmem:[%s4] sm:$0x3]
        %v661 = vperm.slane %v659, 0
        %v662 = vperm.slane %v659, 1
        %v665 = vadd.f32 %v658, %v661
        %v666 = vadd.f32 %v656, %v662
        %667 = vst [vmem:[%s287] sm:$0xff] %v665
        %668 = vst [vmem:[%s287 + $0x8] sm:$0xff] %v666
        %s669 = sand.u32 %s142, 1
        %s670 = scalar_lea.sflag [#allocation4], %s669
        %s671 = sand.u32 %s142, 1
        %s672 = smul.addr %s671, 16
        %s673 = scalar_lea.vmem [#allocation10], %s672
        // Predicated region
        $region57: #{tpu_custom_call.1} parent=39 // pred_check
          %p674 = pneg %p152
        $region58: #{tpu_custom_call.1} parent=39 // pred_check_branch
          %676 = sbr.rel (%p674) target = $region60
        $region59: #{tpu_custom_call.1} parent=39 // pred_region
          %678 = vsyncadd %s670, 0
          %s679 = smul.addr %s24, 2
          %s680 = smul.addr %s679, 8
          %s681 = scalar_lea.hbm %s5, %s680
          %s683 = sshll.u32 %s673, 4
          %s684 = int_to_ptr.vmem [resolvable:$true] %s683
          %s685 = sshll.u32 %s681, 4
          %s686 = int_to_ptr.hbm [resolvable:$true] %s685
          %688 = dma.vmem_to_hbm [thread:$0]  %s684, 256, %s686, %s670
        $region60: #{tpu_custom_call.1} parent=39 // pred_fallthru
          _
      $region40: #{tpu_custom_call.1} parent=5 // pred_fallthru
        _
      %p689 = scmp.le.s32.totalorder 2, %s19
      // Predicated region
      $region61: #{tpu_custom_call.1} parent=5 // pred_check
        %p690 = pneg %p689
      $region62: #{tpu_custom_call.1} parent=5 // pred_check_branch
        %692 = sbr.rel (%p690) target = $region64
      $region63: #{tpu_custom_call.1} parent=5 // pred_region
        %s693 = ssub.s32 %s19, 2
        // Predicated region
        $region65: #{tpu_custom_call.1} parent=63 // pred_check
          %p694 = pneg %p158
        $region66: #{tpu_custom_call.1} parent=63 // pred_check_branch
          %696 = sbr.rel (%p694) target = $region68
        $region67: #{tpu_custom_call.1} parent=63 // pred_region
          %s697 = sand.u32 %s143, 1
          %s698 = scalar_lea.sflag [#allocation4], %s697
          %s699 = sand.u32 %s143, 1
          %s700 = smul.addr %s699, 16
          %s701 = scalar_lea.vmem [#allocation10], %s700
          %703 = dma.done %s698, 256
        $region68: #{tpu_custom_call.1} parent=63 // pred_fallthru
          _
      $region64: #{tpu_custom_call.1} parent=5 // pred_fallthru
        _
    $region6: #{tpu_custom_call.1} parent=1 // loop_footer
      %s23 = sadd.s32 1, %s19
    $region7: #{tpu_custom_call.1} parent=1 // loop_footer_branch
      %18 = sbr.rel target = $region3
    $region8: #{tpu_custom_call.1} parent=1 // loop_exit
      _
    %704 = vsyncpa [#allocation3], 1
    %s705 = scalar_lea.sflag [#allocation3], 1
    %706 = vsyncpa %s705, 1
    %707 = vsyncpa [#allocation6], 1
    %708 = vsyncpa [#allocation9], 1
    %709 = vsyncpa [#allocation4], 1
    %s710 = scalar_lea.sflag [#allocation4], 1
    %711 = vsyncpa %s710, 1

</llo_original>
